<compile_context>
chip_gen: v6e
topology: v6e:2x2x1
jax: 0.10.0
libtpu: 0.0.40
codegen_flags: <defaults>
</compile_context>

<pallas_src>
import math
import functools

import jax
import jax.numpy as jnp
from jax.experimental import pallas as pl
from jax.experimental.pallas import tpu as pltpu


def _round_up(x, m):
    return (x + m - 1) // m * m


def _vmem_capacity_bytes():
    try:
        return int(pltpu.get_tpu_info().vmem_capacity_bytes)
    except Exception:
        return 64 << 20  # conservative fallback = v7x per-TensorCore VMEM


def _pick_tiles(B, C, D_pad, op_isz, out_isz, vmem_cap):
    """Pick (TB, TC) so double-buffered tiles + in-kernel temps fit VMEM."""
    TB = min(_round_up(B, 8), 512)
    TC = min(_round_up(C, 128), 2048)
    budget = min(int(vmem_cap * 0.6), 96 << 20)

    def need(tb, tc):
        inputs = 2 * (tb * D_pad + D_pad * tc) * op_isz   # double-buffered x / w^T tiles
        outputs = 2 * tb * tc * out_isz                   # double-buffered output tile
        temps = 4 * tb * tc * 4                           # acc / scaled / col_ids / one_hot
        small = 2 * (3 * tb + tc) * 4                     # inv_xs, label, inv_w blocks
        return inputs + outputs + temps + small + (2 << 20)

    while TC > 128 and need(TB, TC) > budget:
        TC = max(128, (TC // 2) // 128 * 128)
    while TB > 8 and need(TB, TC) > budget:
        TB = max(8, (TB // 2) // 8 * 8)
    return TB, TC, need(TB, TC)


def arc_margin_kernel(x_ref, wt_ref, inv_xs_ref, inv_w_ref, label_ref, out_ref, *,
                      cos_m, sin_m, th, mm, s, inv_s, easy_margin, tc):
    # grid axis 0 = class tiles (outer, weight-stationary), axis 1 = batch tiles.
    # Raw logits on the MXU with f32 accumulation; normalization + s folded in
    # afterwards via precomputed row/column scales.
    acc = jnp.dot(x_ref[...], wt_ref[...], preferred_element_type=jnp.float32)  # (TB, TC)
    scaled = acc * inv_xs_ref[...] * inv_w_ref[...]        # == s * cosine, f32

    # one-hot for this class tile: global column id == label.
    col0 = pl.program_id(0) * tc
    col_ids = col0 + jax.lax.broadcasted_iota(jnp.int32, scaled.shape, 1)
    one_hot = col_ids == label_ref[...]                    # (TB, TC) bool

    # Margin math only at the label column: gather s*cos(theta) per row
    # (at most one True per row; rows whose label lies outside this class tile
    #  get 0, but their phi is then unused by the final where()).
    cos_t = jnp.sum(jnp.where(one_hot, scaled, 0.0), axis=1, keepdims=True) * inv_s
    sin_t = jnp.sqrt(jnp.clip(1.0 - cos_t * cos_t, 0.0, 1.0))
    phi = cos_t * cos_m - sin_t * sin_m
    if easy_margin:
        phi = jnp.where(cos_t > 0.0, phi, cos_t)
    else:
        phi = jnp.where(cos_t > th, phi, cos_t - mm)

    out_ref[...] = jnp.where(one_hot, phi * s, scaled).astype(out_ref.dtype)


def arc_margin_product(x, weight, label, *, s, m, easy_margin=False,
                       out_dtype=jnp.float32):
    """Pallas-backed ArcMarginProduct.forward.

    x:      (B, in_features)
    weight: (out_features, in_features)   (PyTorch nn.Linear convention)
    label:  (B,) integer class ids
    returns (B, out_features) logits in `out_dtype`.
    """
    B, D = x.shape
    C, D2 = weight.shape
    assert D == D2

    op_dtype = x.dtype                       # MXU operand dtype (feed bf16 for full rate)
    op_isz = jnp.dtype(op_dtype).itemsize
    out_isz = jnp.dtype(out_dtype).itemsize

    D_pad = _round_up(D, 128)                # exact: zero-padding the contraction dim
    vmem_cap = _vmem_capacity_bytes()
    TB, TC, need = _pick_tiles(B, C, D_pad, op_isz, out_isz, vmem_cap)
    B_pad = _round_up(B, TB)
    C_pad = _round_up(C, TC)

    eps = 1e-12                              # matches F.normalize
    xf = x.astype(jnp.float32)
    wf = weight.astype(jnp.float32)
    inv_xs = (s / jnp.maximum(jnp.sqrt(jnp.sum(xf * xf, axis=1, keepdims=True)), eps))
    inv_w = (1.0 / jnp.maximum(jnp.sqrt(jnp.sum(wf * wf, axis=1)), eps)).reshape(1, C)

    # Pre-transpose weight to (D, C): lane-dense class axis, no in-kernel .T.
    # TODO(synk): store the weight pre-transposed/pre-padded as (D_pad, C_pad)
    # in the surrounding model to avoid this per-call transpose + pad.
    wt = weight.T.astype(op_dtype)
    xp = x.astype(op_dtype)

    if D_pad != D:
        xp = jnp.pad(xp, ((0, 0), (0, D_pad - D)))
        wt = jnp.pad(wt, ((0, D_pad - D), (0, 0)))
    if C_pad != C:
        wt = jnp.pad(wt, ((0, 0), (0, C_pad - C)))                       # zero logits
        inv_w = jnp.pad(inv_w, ((0, 0), (0, C_pad - C)), constant_values=1.0)
    if B_pad != B:
        xp = jnp.pad(xp, ((0, B_pad - B), (0, 0)))
        inv_xs = jnp.pad(inv_xs, ((0, B_pad - B), (0, 0)), constant_values=1.0)

    lp = label.astype(jnp.int32).reshape(-1, 1)
    if B_pad != B:
        # Padded rows use label 0; only valid because they are sliced off below.
        lp = jnp.pad(lp, ((0, B_pad - B), (0, 0)))

    # Class axis OUTER (weight streamed from HBM exactly once), batch INNER.
    grid = (C_pad // TC, B_pad // TB)

    vmem_limit = int(min(vmem_cap, max(need + (8 << 20), 32 << 20)))

    kernel = functools.partial(
        arc_margin_kernel,
        cos_m=math.cos(m),
        sin_m=math.sin(m),
        th=math.cos(math.pi - m),
        mm=math.sin(math.pi - m) * m,
        s=float(s),
        inv_s=1.0 / float(s),
        easy_margin=easy_margin,
        tc=TC,
    )

    out_padded = pl.pallas_call(
        kernel,
        out_shape=jax.ShapeDtypeStruct((B_pad, C_pad), out_dtype),
        grid_spec=pltpu.PrefetchScalarGridSpec(
            num_scalar_prefetch=0,
            grid=grid,
            in_specs=[
                pl.BlockSpec((TB, D_pad), lambda j, i: (i, 0)),   # x batch tile
                pl.BlockSpec((D_pad, TC), lambda j, i: (0, j)),   # weight^T class tile (stationary)
                pl.BlockSpec((TB, 1), lambda j, i: (i, 0)),       # s / ||x||  per row
                pl.BlockSpec((1, TC), lambda j, i: (0, j)),       # 1 / ||w_c|| per class
                pl.BlockSpec((TB, 1), lambda j, i: (i, 0)),       # labels per batch tile
            ],
            out_specs=pl.BlockSpec((TB, TC), lambda j, i: (i, j)),
        ),
        compiler_params=pltpu.CompilerParams(
            dimension_semantics=("parallel", "parallel"),
            vmem_limit_bytes=vmem_limit,
        ),
    )(xp, wt, inv_xs, inv_w, lp)

    if B_pad == B and C_pad == C:
        return out_padded
    return out_padded[:B, :C]


def _reference(x, weight, label, *, s, m, easy_margin=False):
    """Pure-JAX reference mirroring the PyTorch forward."""
    eps = 1e-12
    xn = x / jnp.maximum(jnp.linalg.norm(x, axis=1, keepdims=True), eps)
    wn = weight / jnp.maximum(jnp.linalg.norm(weight, axis=1, keepdims=True), eps)
    cosine = xn @ wn.T
    sine = jnp.sqrt(jnp.clip(1.0 - cosine ** 2, 0.0, 1.0))
    phi = cosine * math.cos(m) - sine * math.sin(m)
    if easy_margin:
        phi = jnp.where(cosine > 0, phi, cosine)
    else:
        phi = jnp.where(cosine > math.cos(math.pi - m), phi,
                        cosine - math.sin(math.pi - m) * m)
    one_hot = jax.nn.one_hot(label, weight.shape[0], dtype=cosine.dtype)
    return (one_hot * phi + (1.0 - one_hot) * cosine) * s


if __name__ == "__main__":
    # Small shapes consistent with the module: batch=8, in_features=32, classes=16
    B, IN_FEATURES, OUT_FEATURES = 8, 32, 16
    S, M = 30.0, 0.5

    key = jax.random.PRNGKey(0)
    kx, kw, kl = jax.random.split(key, 3)

    x = jax.random.normal(kx, (B, IN_FEATURES), dtype=jnp.float32)

    # Deterministic xavier_uniform_ init for weight (out_features, in_features)
    bound = math.sqrt(6.0 / (IN_FEATURES + OUT_FEATURES))
    weight = jax.random.uniform(kw, (OUT_FEATURES, IN_FEATURES),
                                minval=-bound, maxval=bound, dtype=jnp.float32)

    label = jax.random.randint(kl, (B,), 0, OUT_FEATURES, dtype=jnp.int32)

    out = arc_margin_product(x, weight, label, s=S, m=M, easy_margin=False)
    out = jax.block_until_ready(out)

    ref = _reference(x, weight, label, s=S, m=M, easy_margin=False)
    assert out.shape == (B, OUT_FEATURES)
    assert jnp.allclose(out, ref, atol=1e-4, rtol=1e-4), "mismatch vs reference"

    print("KERNEL_OK")
</pallas_src>

<mosaic_0001>
module attributes {stable_mosaic.version = 11 : i64} {
  func.func @arc_margin_kernel(%arg0: i32, %arg1: i32, %arg2: memref<8x128xf32, #tpu.memory_space<vmem>>, %arg3: memref<128x128xf32, #tpu.memory_space<vmem>>, %arg4: memref<8x1xf32, #tpu.memory_space<vmem>>, %arg5: memref<1x128xf32, #tpu.memory_space<vmem>>, %arg6: memref<8x1xi32, #tpu.memory_space<vmem>>, %arg7: memref<8x128xf32, #tpu.memory_space<vmem>>) attributes {dimension_semantics = [#tpu.dimension_semantics<parallel>, #tpu.dimension_semantics<parallel>], iteration_bounds = array<i64: 1, 1>, scalar_prefetch = 0 : i64, scratch_operands = 0 : i64, tpu.core_type = #tpu.core_type<tc>, window_params = [{transform_indices = @transform_0, window_bounds = array<i64: 8, 128>}, {transform_indices = @transform_1, window_bounds = array<i64: 128, 128>}, {transform_indices = @transform_2, window_bounds = array<i64: 8, 1>}, {transform_indices = @transform_3, window_bounds = array<i64: 1, 128>}, {transform_indices = @transform_4, window_bounds = array<i64: 8, 1>}, {transform_indices = @transform_5, window_bounds = array<i64: 8, 128>}]} {
    %c0 = arith.constant 0 : index
    %c0_0 = arith.constant 0 : index
    %0 = vector.load %arg2[%c0, %c0_0] : memref<8x128xf32, #tpu.memory_space<vmem>>, vector<8x128xf32>
    %c0_1 = arith.constant 0 : index
    %c0_2 = arith.constant 0 : index
    %1 = vector.load %arg3[%c0_1, %c0_2] : memref<128x128xf32, #tpu.memory_space<vmem>>, vector<128x128xf32>
    %cst = arith.constant dense<0.000000e+00> : vector<8x128xf32>
    %2 = tpu.matmul %0, %1, %cst {dimension_numbers = #tpu.dot_dimension_numbers<[1], [0], [0], [1], [0, 0, 1, 1], [], []>} : vector<8x128xf32>, vector<128x128xf32>, vector<8x128xf32> -> vector<8x128xf32>
    %c0_3 = arith.constant 0 : index
    %c0_4 = arith.constant 0 : index
    %3 = vector.load %arg4[%c0_3, %c0_4] : memref<8x1xf32, #tpu.memory_space<vmem>>, vector<8x1xf32>
    %4 = vector.broadcast %3 : vector<8x1xf32> to vector<8x128xf32>
    %5 = arith.mulf %2, %4 : vector<8x128xf32>
    %c0_5 = arith.constant 0 : index
    %c0_6 = arith.constant 0 : index
    %6 = vector.load %arg5[%c0_5, %c0_6] : memref<1x128xf32, #tpu.memory_space<vmem>>, vector<1x128xf32>
    %7 = vector.broadcast %6 : vector<1x128xf32> to vector<8x128xf32>
    %8 = arith.mulf %5, %7 : vector<8x128xf32>
    %c128_i32 = arith.constant 128 : i32
    %9 = arith.muli %arg0, %c128_i32 : i32
    %10 = tpu.iota {dimensions = array<i32: 1>} : vector<8x128xi32>
    %11 = vector.broadcast %9 : i32 to vector<8x128xi32>
    %12 = arith.addi %11, %10 : vector<8x128xi32>
    %c0_7 = arith.constant 0 : index
    %c0_8 = arith.constant 0 : index
    %13 = vector.load %arg6[%c0_7, %c0_8] : memref<8x1xi32, #tpu.memory_space<vmem>>, vector<8x1xi32>
    %14 = vector.broadcast %13 : vector<8x1xi32> to vector<8x128xi32>
    %15 = arith.cmpi eq, %12, %14 : vector<8x128xi32>
    %cst_9 = arith.constant 0.000000e+00 : f32
    %16 = vector.broadcast %cst_9 : f32 to vector<8x128xf32>
    %17 = arith.select %15, %8, %16 : vector<8x128xi1>, vector<8x128xf32>
    %cst_10 = arith.constant dense<0.000000e+00> : vector<8xf32>
    %18 = vector.multi_reduction <add>, %17, %cst_10 [1] : vector<8x128xf32> to vector<8xf32>
    %19 = vector.shape_cast %18 : vector<8xf32> to vector<8x1xf32>
    %cst_11 = arith.constant 0.0333333351 : f32
    %20 = vector.broadcast %cst_11 : f32 to vector<8x1xf32>
    %21 = arith.mulf %19, %20 : vector<8x1xf32>
    %22 = arith.mulf %21, %21 : vector<8x1xf32>
    %cst_12 = arith.constant 1.000000e+00 : f32
    %23 = vector.broadcast %cst_12 : f32 to vector<8x1xf32>
    %24 = arith.subf %23, %22 : vector<8x1xf32>
    %cst_13 = arith.constant 0.000000e+00 : f32
    %cst_14 = arith.constant 1.000000e+00 : f32
    %25 = vector.broadcast %cst_13 : f32 to vector<8x1xf32>
    %26 = arith.maximumf %25, %24 : vector<8x1xf32>
    %27 = vector.broadcast %cst_14 : f32 to vector<8x1xf32>
    %28 = arith.minimumf %27, %26 : vector<8x1xf32>
    %29 = math.sqrt %28 : vector<8x1xf32>
    %cst_15 = arith.constant 0.87758255 : f32
    %30 = vector.broadcast %cst_15 : f32 to vector<8x1xf32>
    %31 = arith.mulf %21, %30 : vector<8x1xf32>
    %cst_16 = arith.constant 0.47942555 : f32
    %32 = vector.broadcast %cst_16 : f32 to vector<8x1xf32>
    %33 = arith.mulf %29, %32 : vector<8x1xf32>
    %34 = arith.subf %31, %33 : vector<8x1xf32>
    %cst_17 = arith.constant -0.87758255 : f32
    %35 = vector.broadcast %cst_17 : f32 to vector<8x1xf32>
    %36 = arith.cmpf ogt, %21, %35 : vector<8x1xf32>
    %cst_18 = arith.constant 0.239712775 : f32
    %37 = vector.broadcast %cst_18 : f32 to vector<8x1xf32>
    %38 = arith.subf %21, %37 : vector<8x1xf32>
    %39 = arith.select %36, %34, %38 : vector<8x1xi1>, vector<8x1xf32>
    %cst_19 = arith.constant 3.000000e+01 : f32
    %40 = vector.broadcast %cst_19 : f32 to vector<8x1xf32>
    %41 = arith.mulf %39, %40 : vector<8x1xf32>
    %42 = vector.shape_cast %41 : vector<8x1xf32> to vector<8x1xf32>
    %43 = vector.broadcast %42 : vector<8x1xf32> to vector<8x128xf32>
    %44 = arith.select %15, %43, %8 : vector<8x128xi1>, vector<8x128xf32>
    %c0_20 = arith.constant 0 : index
    %c0_21 = arith.constant 0 : index
    %45 = vector.load %arg7[%c0_20, %c0_21] : memref<8x128xf32, #tpu.memory_space<vmem>>, vector<8x128xf32>
    tpu.vector_store %arg7[%c0_20, %c0_21], %44 {strides = array<i32>} : memref<8x128xf32, #tpu.memory_space<vmem>>, vector<8x128xf32>,
    return
  }
  func.func @transform_0(%arg0: i32, %arg1: i32) -> (i32, i32) {
    %c0_i32 = arith.constant 0 : i32
    %c0_i32_0 = arith.constant 0 : i32
    return %arg1, %c0_i32 : i32, i32
  }
  func.func @transform_1(%arg0: i32, %arg1: i32) -> (i32, i32) {
    %c0_i32 = arith.constant 0 : i32
    %c0_i32_0 = arith.constant 0 : i32
    return %c0_i32, %arg0 : i32, i32
  }
  func.func @transform_2(%arg0: i32, %arg1: i32) -> (i32, i32) {
    %c0_i32 = arith.constant 0 : i32
    %c0_i32_0 = arith.constant 0 : i32
    return %arg1, %c0_i32 : i32, i32
  }
  func.func @transform_3(%arg0: i32, %arg1: i32) -> (i32, i32) {
    %c0_i32 = arith.constant 0 : i32
    %c0_i32_0 = arith.constant 0 : i32
    return %c0_i32, %arg0 : i32, i32
  }
  func.func @transform_4(%arg0: i32, %arg1: i32) -> (i32, i32) {
    %c0_i32 = arith.constant 0 : i32
    %c0_i32_0 = arith.constant 0 : i32
    return %arg1, %c0_i32 : i32, i32
  }
  func.func @transform_5(%arg0: i32, %arg1: i32) -> (i32, i32) {
    %c0_i32 = arith.constant 0 : i32
    return %arg1, %arg0 : i32, i32
  }
}

</mosaic_0001>

<llo_original>
// kernel: tpu_custom_call.1
$region0: #{tpu_custom_call.1}
  #allocation0 [shape = 'u32[]', space=smem, size = 0x4, offset = 0x4, fixed_abs, tag = 'smem constant byte address 0x4 - core index']
  #allocation1 [shape = 'u32[144,128]{1,0:T(1,128)}', space=vmem, size = 0x12000, scoped, tag = 'internal scratch']
  %s0 = inlined_call_operand.vmem [shape: f32[8,128], index: 0, kind: input, shape index: {}]
  %s1 = inlined_call_operand.hbm [shape: f32[128,128], index: 1, kind: input, shape index: {}]
  %s2 = inlined_call_operand.vmem [shape: f32[8,1], index: 2, kind: input, shape index: {}]
  %s3 = inlined_call_operand.vmem [shape: f32[1,128], index: 3, kind: input, shape index: {}]
  %s4 = inlined_call_operand.vmem [shape: s32[8,1], index: 4, kind: input, shape index: {}]
  %s5 = inlined_call_operand.hbm [shape: f32[8,128], index: 5, kind: output, shape index: {}]
  %s6 = sld [smem:[#allocation0]]
  $region34: #{tpu_custom_call.1} parent=0
    _
  %s8 = ssub.s32 1, %s6
  %s9 = scalar_select 0, %s8, %s6
  $region1: #{tpu_custom_call.1} parent=0
    #allocation2 [shape = 'u8[65536]{0}', space=vmem, size = 0x10000, scoped, tag = 'input window, operand 1, single buffered']
    #allocation3 [shape = 's32[1]{0}', space=sflag, size = 0x4, scoped, tag = 'scoped memory for tpu_custom_call.1']
    #allocation4 [shape = 's32[1]{0}', space=sflag, size = 0x4, scoped, tag = 'scoped memory for tpu_custom_call.1']
    #allocation5 [shape = 'u8[4096]{0}', space=vmem, size = 0x1000, scoped, tag = 'output window, operand 0, single buffered']
    %10 = vsyncpa [#allocation3], 0
    %11 = vsyncpa [#allocation4], 0
    // Predicated region
    $region2: #{tpu_custom_call.1} parent=1 // pred_check
      _
    $region3: #{tpu_custom_call.1} parent=1 // pred_check_branch
      %13 = sbr.rel (0) target = $region5
    $region4: #{tpu_custom_call.1} parent=1 // pred_region
      _
    $region5: #{tpu_custom_call.1} parent=1 // pred_fallthru
      _
    // Predicated region
    $region6: #{tpu_custom_call.1} parent=1 // pred_check
      _
    $region7: #{tpu_custom_call.1} parent=1 // pred_check_branch
      %15 = sbr.rel (0) target = $region9
    $region8: #{tpu_custom_call.1} parent=1 // pred_region
      %s17 = ssub.s32 2048, 2048
      %18 = vsyncadd [#allocation3], %s17
      %s19 = sshll.u32 [#allocation2], 4
      %s20 = int_to_ptr.vmem [resolvable:$true] %s19
      %25 = dma.hbm_to_vmem [thread:$0]  %s1, 2048, %s20, [#allocation3], 128, 128, 8
    $region9: #{tpu_custom_call.1} parent=1 // pred_fallthru
      _
    // Predicated region
    $region10: #{tpu_custom_call.1} parent=1 // pred_check
      _
    $region11: #{tpu_custom_call.1} parent=1 // pred_check_branch
      %27 = sbr.rel (0) target = $region13
    $region12: #{tpu_custom_call.1} parent=1 // pred_region
      _
    $region13: #{tpu_custom_call.1} parent=1 // pred_fallthru
      _
    // Predicated region
    $region14: #{tpu_custom_call.1} parent=1 // pred_check
      _
    $region15: #{tpu_custom_call.1} parent=1 // pred_check_branch
      %29 = sbr.rel (0) target = $region17
    $region16: #{tpu_custom_call.1} parent=1 // pred_region
      _
    $region17: #{tpu_custom_call.1} parent=1 // pred_fallthru
      _
    // Predicated region
    $region18: #{tpu_custom_call.1} parent=1 // pred_check
      _
    $region19: #{tpu_custom_call.1} parent=1 // pred_check_branch
      %31 = sbr.rel (0) target = $region21
    $region20: #{tpu_custom_call.1} parent=1 // pred_region
      _
    $region21: #{tpu_custom_call.1} parent=1 // pred_fallthru
      _
    // Predicated region
    $region22: #{tpu_custom_call.1} parent=1 // pred_check
      _
    $region23: #{tpu_custom_call.1} parent=1 // pred_check_branch
      %33 = sbr.rel (0) target = $region25
    $region24: #{tpu_custom_call.1} parent=1 // pred_region
      %34 = dma.done [#allocation3], 2048
    $region25: #{tpu_custom_call.1} parent=1 // pred_fallthru
      _
    %v35 = vld [vmem:[%s0] sm:$0xff]
    %v36 = vld [vmem:[#allocation2] sm:$0xff]
    %v37 = vld [vmem:[#allocation2 + $0x8] sm:$0xff]
    %v38 = vld [vmem:[#allocation2 + $0x10] sm:$0xff]
    %v39 = vld [vmem:[#allocation2 + $0x18] sm:$0xff]
    %v40 = vld [vmem:[#allocation2 + $0x20] sm:$0xff]
    %v41 = vld [vmem:[#allocation2 + $0x28] sm:$0xff]
    %v42 = vld [vmem:[#allocation2 + $0x30] sm:$0xff]
    %v43 = vld [vmem:[#allocation2 + $0x38] sm:$0xff]
    %v44 = vld [vmem:[#allocation2 + $0x40] sm:$0xff]
    %v45 = vld [vmem:[#allocation2 + $0x48] sm:$0xff]
    %v46 = vld [vmem:[#allocation2 + $0x50] sm:$0xff]
    %v47 = vld [vmem:[#allocation2 + $0x58] sm:$0xff]
    %v48 = vld [vmem:[#allocation2 + $0x60] sm:$0xff]
    %v49 = vld [vmem:[#allocation2 + $0x68] sm:$0xff]
    %v50 = vld [vmem:[#allocation2 + $0x70] sm:$0xff]
    %v51 = vld [vmem:[#allocation2 + $0x78] sm:$0xff]
    %52 = vmatprep.subr.mxu0 0.0
    %53 = vmatpush1.msra.mxu0 %v51
    %54 = vmatprep.subr.mxu0 0.0
    %55 = vmatpush1.msra.mxu0 %v50
    %56 = vmatprep.subr.mxu0 0.0
    %57 = vmatpush1.msra.mxu0 %v49
    %58 = vmatprep.subr.mxu0 0.0
    %59 = vmatpush1.msra.mxu0 %v48
    %60 = vmatprep.subr.mxu0 0.0
    %61 = vmatpush1.msra.mxu0 %v47
    %62 = vmatprep.subr.mxu0 0.0
    %63 = vmatpush1.msra.mxu0 %v46
    %64 = vmatprep.subr.mxu0 0.0
    %65 = vmatpush1.msra.mxu0 %v45
    %66 = vmatprep.subr.mxu0 0.0
    %67 = vmatpush1.msra.mxu0 %v44
    %68 = vmatprep.subr.mxu0 0.0
    %69 = vmatpush1.msra.mxu0 %v43
    %70 = vmatprep.subr.mxu0 0.0
    %71 = vmatpush1.msra.mxu0 %v42
    %72 = vmatprep.subr.mxu0 0.0
    %73 = vmatpush1.msra.mxu0 %v41
    %74 = vmatprep.subr.mxu0 0.0
    %75 = vmatpush1.msra.mxu0 %v40
    %76 = vmatprep.subr.mxu0 0.0
    %77 = vmatpush1.msra.mxu0 %v39
    %78 = vmatprep.subr.mxu0 0.0
    %79 = vmatpush1.msra.mxu0 %v38
    %80 = vmatprep.subr.mxu0 0.0
    %81 = vmatpush1.msra.mxu0 %v37
    %82 = vmatprep.subr.mxu0 0.0
    %83 = vmatpush1.msra.mxu0 %v36
    %84 = vmatprep.subr.mxu0 0.0
    %85 = vmatpush2.msra.mxu0 0.0
    %86 = vmatprep.subr.mxu0 0.0
    %87 = vmatpush2.msra.mxu0 0.0
    %88 = vmatprep.subr.mxu0 0.0
    %89 = vmatpush2.msra.mxu0 0.0
    %90 = vmatprep.subr.mxu0 0.0
    %91 = vmatpush2.msra.mxu0 0.0
    %92 = vmatprep.subr.mxu0 0.0
    %93 = vmatpush2.msra.mxu0 0.0
    %94 = vmatprep.subr.mxu0 0.0
    %95 = vmatpush2.msra.mxu0 0.0
    %96 = vmatprep.subr.mxu0 0.0
    %97 = vmatpush2.msra.mxu0 0.0
    %98 = vmatprep.subr.mxu0 0.0
    %99 = vmatpush2.msra.mxu0 0.0
    %100 = vmatprep.subr.mxu0 0.0
    %101 = vmatpush2.msra.mxu0 0.0
    %102 = vmatprep.subr.mxu0 0.0
    %103 = vmatpush2.msra.mxu0 0.0
    %104 = vmatprep.subr.mxu0 0.0
    %105 = vmatpush2.msra.mxu0 0.0
    %106 = vmatprep.subr.mxu0 0.0
    %107 = vmatpush2.msra.mxu0 0.0
    %108 = vmatprep.subr.mxu0 0.0
    %109 = vmatpush2.msra.mxu0 0.0
    %110 = vmatprep.subr.mxu0 0.0
    %111 = vmatpush2.msra.mxu0 0.0
    %112 = vmatprep.subr.mxu0 0.0
    %113 = vmatpush2.msra.mxu0 0.0
    %114 = vmatprep.subr.mxu0 0.0
    %115 = vmatpush2.msra.mxu0 0.0
    %116 = vmatprep.mubr.f32.mxu0 0.0
    %117 = vmatmul.mubr.f32.gmra.mxu0 %v35
    %v118 = vpop.f32.mrf.mxu0
    %v119 = vadd.f32 0.0, %v118
    %v120 = vpop.f32.mrf.mxu0
    %121 = vdwg.mxu0
    %v122 = vld [vmem:[%s2] sm:$0xff]
    %124 = vset.pattern.permute.xlu0 0
    %125 = vperm.xlu0 %124, %v122
    %v126 = vpop.permute.xlu0 %125
    %v128 = vmul.f32 %v119, %v126
    %v129 = vld [vmem:[%s3] sm:$0x1]
    %v131 = vlaneseq
    %v132 = vshrl.u32 %v131, 7
    %v133 = vsub.s32 0, %v132
    %v134 = vrot.slane %v129, %v133
    %v136 = vmul.f32 %v128, %v134
    %s137 = smul.u32 0, 128
    %v138 = vlaneseq
    %v139 = vand.u32 %v138, 127
    %v140 = vstv %s137
    %v141 = vadd.s32 %v140, %v139
    %v142 = vld [vmem:[%s4] sm:$0xff]
    %143 = vset.pattern.permute.xlu0 0
    %144 = vperm.xlu0 %143, %v142
    %v145 = vpop.permute.xlu0 %144
    %vm146 = vcmp.eq.s32.totalorder %v141, %v145
    %v147 = vsel %vm146, %v136, 0.0
    %148 = vadd.xlane.f32.xlu0 %v147
    %v149 = vpop.xlane.xlu0 %148
    %v150 = vmul.f32 %v149, 0.033333335
    %v151 = vmul.f32 %v150, %v150
    %v152 = vsub.f32 1.0, %v151
    %v153 = vmax.f32 %v152, 0.0
    %v154 = vmin.f32 %v153, 1.0
    %v155 = vrsqrt.pop %v154
    %v156 = vmul.f32 %v154, %v155
    %vm157 = vcmp.eq.f32.partialorder %v154, inf
    %v158 = vsel %vm157, %v154, %v156
    %vm159 = vcmp.eq.f32.partialorder %v154, 0.0
    %v160 = vand.u32 %v154, 2147483648
    %v161 = vsel %vm159, %v160, %v158
    %v162 = vmul.f32 %v150, 0.87758255
    %v163 = vmul.f32 %v161, 0.47942555
    %v164 = vsub.f32 %v162, %v163
    %vm165 = vcmp.gt.f32.partialorder %v150, -0.87758255
    %v166 = vsub.f32 %v150, 0.23971277
    %v167 = vsel %vm165, %v164, %v166
    %v168 = vmul.f32 %v167, 30.0
    %v169 = vsel %vm146, %v168, %v136
    %170 = vst [vmem:[#allocation5] sm:$0xff] %v169
    // Predicated region
    $region26: #{tpu_custom_call.1} parent=1 // pred_check
      _
    $region27: #{tpu_custom_call.1} parent=1 // pred_check_branch
      %172 = sbr.rel (0) target = $region29
    $region28: #{tpu_custom_call.1} parent=1 // pred_region
      %s174 = ssub.s32 128, 128
      %175 = vsyncadd [#allocation4], %s174
      %s177 = sshll.u32 [#allocation5], 4
      %s178 = int_to_ptr.vmem [resolvable:$true] %s177
      %180 = dma.vmem_to_hbm [thread:$0]  %s178, 128, %s5, [#allocation4]
    $region29: #{tpu_custom_call.1} parent=1 // pred_fallthru
      _
    // Predicated region
    $region30: #{tpu_custom_call.1} parent=1 // pred_check
      _
    $region31: #{tpu_custom_call.1} parent=1 // pred_check_branch
      %182 = sbr.rel (0) target = $region33
    $region32: #{tpu_custom_call.1} parent=1 // pred_region
      %183 = dma.done [#allocation4], 128
    $region33: #{tpu_custom_call.1} parent=1 // pred_fallthru
      _
    %184 = vsyncpa [#allocation3], 1
    %185 = vsyncpa [#allocation4], 1

</llo_original>
